<compile_context>
chip_gen: v5e
topology: v5e:2x2
jax: 0.10.0
libtpu: 0.0.40
codegen_flags: <defaults>
</compile_context>

<pallas_src>
import math
from functools import partial

import jax
import jax.numpy as jnp
from jax import lax
from jax.experimental import pallas as pl
from jax.experimental.pallas import tpu as pltpu


# ---------------------------------------------------------------------------
# Kernel
# ---------------------------------------------------------------------------
def _mlp_kernel(x_ref,
                w1_ref, b1_ref,
                w2_ref, b2_ref,
                w3_ref, b3_ref,
                w4_ref, b4_ref,
                out_ref, *, slope):
    f32 = jnp.float32
    cdt = w1_ref.dtype            # MXU input dtype (bf16 fast path, f32 debug path)

    x = x_ref[...].astype(cdt)

    # Layer 1: Linear + LeakyReLU            (BN1 folded into layer 2's weights)
    h = jnp.dot(x, w1_ref[...], preferred_element_type=f32) + b1_ref[...]
    h = jnp.maximum(h, slope * h).astype(cdt)

    # Layer 2: (BN1-folded) Linear + LeakyReLU
    h = jnp.dot(h, w2_ref[...], preferred_element_type=f32) + b2_ref[...]
    h = jnp.maximum(h, slope * h).astype(cdt)

    # Layer 3: (BN2-folded) Linear + LeakyReLU
    h = jnp.dot(h, w3_ref[...], preferred_element_type=f32) + b3_ref[...]
    h = jnp.maximum(h, slope * h).astype(cdt)

    # Layer 4: (BN3-folded) Linear
    out = jnp.dot(h, w4_ref[...], preferred_element_type=f32) + b4_ref[...]
    out_ref[...] = out.astype(out_ref.dtype)


# ---------------------------------------------------------------------------
# Wrapper-side parameter prep: transpose Linear weights and fold each eval-mode
# BatchNorm affine into the *next* Linear. Folding is done in f32; the transposed
# weights are then cast to `compute_dtype` (bf16 by default). Biases stay f32.
# ---------------------------------------------------------------------------
def prepare_kernel_params(params, eps=1e-5, compute_dtype=jnp.bfloat16):
    ws, bs, bns = params
    w1, w2, w3, w4 = ws
    b1, b2, b3, b4 = bs

    def bn_affine(gamma, beta, mean, var):
        scale = gamma / jnp.sqrt(var + eps)
        shift = beta - mean * scale
        return scale, shift

    s1, t1 = bn_affine(*bns[0])
    s2, t2 = bn_affine(*bns[1])
    s3, t3 = bn_affine(*bns[2])

    w1t = w1.T                                   # (in_f, hid)
    w2t = s1[:, None] * w2.T                     # (hid, 2*hid)   BN1 folded
    b2f = t1 @ w2.T + b2
    w3t = s2[:, None] * w3.T                     # (2*hid, hid)   BN2 folded
    b3f = t2 @ w3.T + b3
    w4t = s3[:, None] * w4.T                     # (hid, out_f)   BN3 folded
    b4f = t3 @ w4.T + b4

    cast_w = lambda w: w.astype(compute_dtype)
    cast_b = lambda b: b.reshape(1, -1).astype(jnp.float32)
    return (cast_w(w1t), cast_b(b1),
            cast_w(w2t), cast_b(b2f),
            cast_w(w3t), cast_b(b3f),
            cast_w(w4t), cast_b(b4f))


# ---------------------------------------------------------------------------
# Forward wrapper
# ---------------------------------------------------------------------------
def mlp_forward(x, kernel_params, *, tm=1024, slope=0.02, min_tiles=2):
    """Eval-mode forward of the Mlp module on TPU via Pallas.

    x may be f32 or bf16; the kernel casts it to the weight dtype before the MXU.
    """
    n, in_f = x.shape
    w1t, b1, w2t, b2, w3t, b3, w4t, b4 = kernel_params
    hid, hid2, out_f = w1t.shape[1], w2t.shape[1], w4t.shape[1]

    # Large row tile for low per-step overhead, but capped so the grid keeps at
    # least `min_tiles` parallel tiles (v7x has 2 TensorCores). Keep tm a
    # multiple of 8 (sublane granularity).
    tm_cap = max(8, ((pl.cdiv(n, min_tiles) + 7) // 8) * 8)
    tm = max(8, min(tm, tm_cap))
    n_tiles = pl.cdiv(n, tm)   # partial trailing block is masked by Pallas (no pad copy)

    row = lambda i: (i, 0)     # row-tiled operand
    inv = lambda i: (0, 0)     # grid-invariant operand (stays VMEM-resident)

    nbytes = lambda a: a.size * a.dtype.itemsize
    flops = 2 * n * (in_f * hid + hid * hid2 + hid2 * hid + hid * out_f)
    bytes_accessed = (nbytes(x) + n * out_f * 4
                      + sum(nbytes(a) for a in (w1t, b1, w2t, b2, w3t, b3, w4t, b4)))

    out = pl.pallas_call(
        partial(_mlp_kernel, slope=slope),
        out_shape=jax.ShapeDtypeStruct((n, out_f), jnp.float32),
        grid_spec=pltpu.PrefetchScalarGridSpec(
            num_scalar_prefetch=0,
            grid=(n_tiles,),
            in_specs=[
                pl.BlockSpec((tm, in_f), row),
                pl.BlockSpec((in_f, hid), inv),
                pl.BlockSpec((1, hid), inv),
                pl.BlockSpec((hid, hid2), inv),
                pl.BlockSpec((1, hid2), inv),
                pl.BlockSpec((hid2, hid), inv),
                pl.BlockSpec((1, hid), inv),
                pl.BlockSpec((hid, out_f), inv),
                pl.BlockSpec((1, out_f), inv),
            ],
            out_specs=pl.BlockSpec((tm, out_f), row),
        ),
        compiler_params=pltpu.CompilerParams(
            dimension_semantics=("parallel",)),
        cost_estimate=pl.CostEstimate(
            flops=int(flops), transcendentals=0, bytes_accessed=int(bytes_accessed)),
    )(x, w1t, b1, w2t, b2, w3t, b3, w4t, b4)

    return out


# ---------------------------------------------------------------------------
# Parameter init (matches reset_parameters: kaiming_normal fan_in / leaky_relu,
# zero biases) + pretend-trained BatchNorm stats so the folding is exercised.
# ---------------------------------------------------------------------------
def init_params(key, in_f, hid_f, out_f):
    dims = [(hid_f, in_f), (2 * hid_f, hid_f), (hid_f, 2 * hid_f), (out_f, hid_f)]
    keys = jax.random.split(key, 4 + 4 * 3)

    ws, bs = [], []
    for i, (o, fan_in) in enumerate(dims):
        std = math.sqrt(2.0 / fan_in)  # kaiming_normal_, mode='fan_in', leaky_relu (a=0)
        ws.append(std * jax.random.normal(keys[i], (o, fan_in), jnp.float32))
        bs.append(jnp.zeros((o,), jnp.float32))

    bns = []
    for j, d in enumerate([hid_f, 2 * hid_f, hid_f]):
        kg, kb, km, kv = keys[4 + 4 * j: 4 + 4 * (j + 1)]
        gamma = 1.0 + 0.1 * jax.random.normal(kg, (d,), jnp.float32)
        beta = 0.1 * jax.random.normal(kb, (d,), jnp.float32)
        mean = 0.05 * jax.random.normal(km, (d,), jnp.float32)
        var = 1.0 + 0.1 * jnp.abs(jax.random.normal(kv, (d,), jnp.float32))
        bns.append((gamma, beta, mean, var))

    return (tuple(ws), tuple(bs), tuple(bns))


# ---------------------------------------------------------------------------
# Pure-JAX f32 reference of the PyTorch eval-mode forward (un-folded layers).
# ---------------------------------------------------------------------------
def _reference(x, params, eps=1e-5, slope=0.02):
    ws, bs, bns = params
    hi = lax.Precision.HIGHEST
    h = x
    for i in range(3):
        h = jnp.dot(h, ws[i].T, precision=hi) + bs[i]
        h = jnp.where(h >= 0, h, slope * h)
        gamma, beta, mean, var = bns[i]
        h = (h - mean) / jnp.sqrt(var + eps) * gamma + beta
        # Dropout: identity in eval mode.
    return jnp.dot(h, ws[3].T, precision=hi) + bs[3]


if __name__ == "__main__":
    in_f, hid_f, out_f = 32, 64, 8
    n = 200  # not a multiple of the row tile -> exercises the masked partial block

    key = jax.random.PRNGKey(0)
    k_param, k_x = jax.random.split(key)

    params = init_params(k_param, in_f, hid_f, out_f)
    x = jax.random.normal(k_x, (n, in_f), jnp.float32)

    kparams = prepare_kernel_params(params, compute_dtype=jnp.bfloat16)
    x_bf16 = x.astype(jnp.bfloat16)   # a bf16 model would hand the kernel bf16 directly

    out = mlp_forward(x_bf16, kparams, tm=1024)
    out = jax.block_until_ready(out)

    ref = _reference(x, params)
    assert out.shape == (n, out_f), f"bad output shape {out.shape}"
    # bf16 MXU path vs f32 HIGHEST reference: check relative to the output scale.
    err = float(jnp.max(jnp.abs(out - ref)))
    scale = float(jnp.max(jnp.abs(ref))) + 1e-6
    assert err <= 3e-2 * scale, f"output mismatch: max_err={err:.4g}, scale={scale:.4g}"

    print("KERNEL_OK")
</pallas_src>

<mosaic_0001>
module attributes {stable_mosaic.version = 11 : i64} {
  func.func @_mlp_kernel(%arg0: i32, %arg1: memref<104x32xbf16, #tpu.memory_space<vmem>>, %arg2: memref<32x64xbf16, #tpu.memory_space<vmem>>, %arg3: memref<1x64xf32, #tpu.memory_space<vmem>>, %arg4: memref<64x128xbf16, #tpu.memory_space<vmem>>, %arg5: memref<1x128xf32, #tpu.memory_space<vmem>>, %arg6: memref<128x64xbf16, #tpu.memory_space<vmem>>, %arg7: memref<1x64xf32, #tpu.memory_space<vmem>>, %arg8: memref<64x8xbf16, #tpu.memory_space<vmem>>, %arg9: memref<1x8xf32, #tpu.memory_space<vmem>>, %arg10: memref<104x8xf32, #tpu.memory_space<vmem>>) attributes {dimension_semantics = [#tpu.dimension_semantics<parallel>], iteration_bounds = array<i64: 2>, scalar_prefetch = 0 : i64, scratch_operands = 0 : i64, tpu.core_type = #tpu.core_type<tc>, window_params = [{transform_indices = @transform_0, window_bounds = array<i64: 104, 32>}, {pipeline_mode = #tpu.pipeline_mode<synchronous>, transform_indices = @transform_1, window_bounds = array<i64: 32, 64>}, {pipeline_mode = #tpu.pipeline_mode<synchronous>, transform_indices = @transform_2, window_bounds = array<i64: 1, 64>}, {pipeline_mode = #tpu.pipeline_mode<synchronous>, transform_indices = @transform_3, window_bounds = array<i64: 64, 128>}, {pipeline_mode = #tpu.pipeline_mode<synchronous>, transform_indices = @transform_4, window_bounds = array<i64: 1, 128>}, {pipeline_mode = #tpu.pipeline_mode<synchronous>, transform_indices = @transform_5, window_bounds = array<i64: 128, 64>}, {pipeline_mode = #tpu.pipeline_mode<synchronous>, transform_indices = @transform_6, window_bounds = array<i64: 1, 64>}, {pipeline_mode = #tpu.pipeline_mode<synchronous>, transform_indices = @transform_7, window_bounds = array<i64: 64, 8>}, {pipeline_mode = #tpu.pipeline_mode<synchronous>, transform_indices = @transform_8, window_bounds = array<i64: 1, 8>}, {transform_indices = @transform_9, window_bounds = array<i64: 104, 8>}]} {
    %c0 = arith.constant 0 : index
    %c0_0 = arith.constant 0 : index
    %0 = vector.load %arg1[%c0, %c0_0] : memref<104x32xbf16, #tpu.memory_space<vmem>>, vector<104x32xbf16>
    %c0_1 = arith.constant 0 : index
    %c0_2 = arith.constant 0 : index
    %1 = vector.load %arg2[%c0_1, %c0_2] : memref<32x64xbf16, #tpu.memory_space<vmem>>, vector<32x64xbf16>
    %cst = arith.constant dense<0.000000e+00> : vector<104x64xf32>
    %2 = tpu.matmul %0, %1, %cst {dimension_numbers = #tpu.dot_dimension_numbers<[1], [0], [0], [1], [0, 0, 1, 1], [], []>} : vector<104x32xbf16>, vector<32x64xbf16>, vector<104x64xf32> -> vector<104x64xf32>
    %c0_3 = arith.constant 0 : index
    %c0_4 = arith.constant 0 : index
    %3 = vector.load %arg3[%c0_3, %c0_4] : memref<1x64xf32, #tpu.memory_space<vmem>>, vector<1x64xf32>
    %4 = vector.broadcast %3 : vector<1x64xf32> to vector<104x64xf32>
    %5 = arith.addf %2, %4 : vector<104x64xf32>
    %cst_5 = arith.constant 2.000000e-02 : f32
    %6 = vector.broadcast %cst_5 : f32 to vector<104x64xf32>
    %7 = arith.mulf %6, %5 : vector<104x64xf32>
    %8 = arith.maximumf %5, %7 : vector<104x64xf32>
    %9 = arith.truncf %8 : vector<104x64xf32> to vector<104x64xbf16>
    %c0_6 = arith.constant 0 : index
    %c0_7 = arith.constant 0 : index
    %10 = vector.load %arg4[%c0_6, %c0_7] : memref<64x128xbf16, #tpu.memory_space<vmem>>, vector<64x128xbf16>
    %cst_8 = arith.constant dense<0.000000e+00> : vector<104x128xf32>
    %11 = tpu.matmul %9, %10, %cst_8 {dimension_numbers = #tpu.dot_dimension_numbers<[1], [0], [0], [1], [0, 0, 1, 1], [], []>} : vector<104x64xbf16>, vector<64x128xbf16>, vector<104x128xf32> -> vector<104x128xf32>
    %c0_9 = arith.constant 0 : index
    %c0_10 = arith.constant 0 : index
    %12 = vector.load %arg5[%c0_9, %c0_10] : memref<1x128xf32, #tpu.memory_space<vmem>>, vector<1x128xf32>
    %13 = vector.broadcast %12 : vector<1x128xf32> to vector<104x128xf32>
    %14 = arith.addf %11, %13 : vector<104x128xf32>
    %cst_11 = arith.constant 2.000000e-02 : f32
    %15 = vector.broadcast %cst_11 : f32 to vector<104x128xf32>
    %16 = arith.mulf %15, %14 : vector<104x128xf32>
    %17 = arith.maximumf %14, %16 : vector<104x128xf32>
    %18 = arith.truncf %17 : vector<104x128xf32> to vector<104x128xbf16>
    %c0_12 = arith.constant 0 : index
    %c0_13 = arith.constant 0 : index
    %19 = vector.load %arg6[%c0_12, %c0_13] : memref<128x64xbf16, #tpu.memory_space<vmem>>, vector<128x64xbf16>
    %cst_14 = arith.constant dense<0.000000e+00> : vector<104x64xf32>
    %20 = tpu.matmul %18, %19, %cst_14 {dimension_numbers = #tpu.dot_dimension_numbers<[1], [0], [0], [1], [0, 0, 1, 1], [], []>} : vector<104x128xbf16>, vector<128x64xbf16>, vector<104x64xf32> -> vector<104x64xf32>
    %c0_15 = arith.constant 0 : index
    %c0_16 = arith.constant 0 : index
    %21 = vector.load %arg7[%c0_15, %c0_16] : memref<1x64xf32, #tpu.memory_space<vmem>>, vector<1x64xf32>
    %22 = vector.broadcast %21 : vector<1x64xf32> to vector<104x64xf32>
    %23 = arith.addf %20, %22 : vector<104x64xf32>
    %cst_17 = arith.constant 2.000000e-02 : f32
    %24 = vector.broadcast %cst_17 : f32 to vector<104x64xf32>
    %25 = arith.mulf %24, %23 : vector<104x64xf32>
    %26 = arith.maximumf %23, %25 : vector<104x64xf32>
    %27 = arith.truncf %26 : vector<104x64xf32> to vector<104x64xbf16>
    %c0_18 = arith.constant 0 : index
    %c0_19 = arith.constant 0 : index
    %28 = vector.load %arg8[%c0_18, %c0_19] : memref<64x8xbf16, #tpu.memory_space<vmem>>, vector<64x8xbf16>
    %cst_20 = arith.constant dense<0.000000e+00> : vector<104x8xf32>
    %29 = tpu.matmul %27, %28, %cst_20 {dimension_numbers = #tpu.dot_dimension_numbers<[1], [0], [0], [1], [0, 0, 1, 1], [], []>} : vector<104x64xbf16>, vector<64x8xbf16>, vector<104x8xf32> -> vector<104x8xf32>
    %c0_21 = arith.constant 0 : index
    %c0_22 = arith.constant 0 : index
    %30 = vector.load %arg9[%c0_21, %c0_22] : memref<1x8xf32, #tpu.memory_space<vmem>>, vector<1x8xf32>
    %31 = vector.broadcast %30 : vector<1x8xf32> to vector<104x8xf32>
    %32 = arith.addf %29, %31 : vector<104x8xf32>
    %c0_23 = arith.constant 0 : index
    %c0_24 = arith.constant 0 : index
    %33 = vector.load %arg10[%c0_23, %c0_24] : memref<104x8xf32, #tpu.memory_space<vmem>>, vector<104x8xf32>
    tpu.vector_store %arg10[%c0_23, %c0_24], %32 {strides = array<i32>} : memref<104x8xf32, #tpu.memory_space<vmem>>, vector<104x8xf32>,
    return
  }
  func.func @transform_0(%arg0: i32) -> (i32, i32) {
    %c0_i32 = arith.constant 0 : i32
    %c0_i32_0 = arith.constant 0 : i32
    return %arg0, %c0_i32 : i32, i32
  }
  func.func @transform_1(%arg0: i32) -> (i32, i32) {
    %c0_i32 = arith.constant 0 : i32
    %c0_i32_0 = arith.constant 0 : i32
    %c0_i32_1 = arith.constant 0 : i32
    return %c0_i32, %c0_i32_0 : i32, i32
  }
  func.func @transform_2(%arg0: i32) -> (i32, i32) {
    %c0_i32 = arith.constant 0 : i32
    %c0_i32_0 = arith.constant 0 : i32
    %c0_i32_1 = arith.constant 0 : i32
    return %c0_i32, %c0_i32_0 : i32, i32
  }
  func.func @transform_3(%arg0: i32) -> (i32, i32) {
    %c0_i32 = arith.constant 0 : i32
    %c0_i32_0 = arith.constant 0 : i32
    %c0_i32_1 = arith.constant 0 : i32
    return %c0_i32, %c0_i32_0 : i32, i32
  }
  func.func @transform_4(%arg0: i32) -> (i32, i32) {
    %c0_i32 = arith.constant 0 : i32
    %c0_i32_0 = arith.constant 0 : i32
    %c0_i32_1 = arith.constant 0 : i32
    return %c0_i32, %c0_i32_0 : i32, i32
  }
  func.func @transform_5(%arg0: i32) -> (i32, i32) {
    %c0_i32 = arith.constant 0 : i32
    %c0_i32_0 = arith.constant 0 : i32
    %c0_i32_1 = arith.constant 0 : i32
    return %c0_i32, %c0_i32_0 : i32, i32
  }
  func.func @transform_6(%arg0: i32) -> (i32, i32) {
    %c0_i32 = arith.constant 0 : i32
    %c0_i32_0 = arith.constant 0 : i32
    %c0_i32_1 = arith.constant 0 : i32
    return %c0_i32, %c0_i32_0 : i32, i32
  }
  func.func @transform_7(%arg0: i32) -> (i32, i32) {
    %c0_i32 = arith.constant 0 : i32
    %c0_i32_0 = arith.constant 0 : i32
    %c0_i32_1 = arith.constant 0 : i32
    return %c0_i32, %c0_i32_0 : i32, i32
  }
  func.func @transform_8(%arg0: i32) -> (i32, i32) {
    %c0_i32 = arith.constant 0 : i32
    %c0_i32_0 = arith.constant 0 : i32
    %c0_i32_1 = arith.constant 0 : i32
    return %c0_i32, %c0_i32_0 : i32, i32
  }
  func.func @transform_9(%arg0: i32) -> (i32, i32) {
    %c0_i32 = arith.constant 0 : i32
    %c0_i32_0 = arith.constant 0 : i32
    return %arg0, %c0_i32 : i32, i32
  }
}

</mosaic_0001>

<llo_original>
// kernel: tpu_custom_call.1
$region0: #{tpu_custom_call.1}
  #allocation0 [shape = 'u32[]', space=smem, size = 0x4, offset = 0x4, fixed_abs, tag = 'smem constant byte address 0x4 - core index']
  #allocation1 [shape = 'u32[72,128]{1,0:T(1,128)}', space=vmem, size = 0x9000, scoped, tag = 'internal scratch']
  %s0 = inlined_call_operand.vmem [shape: bf16[200,32], index: 0, kind: input, shape index: {}]
  %s1 = inlined_call_operand.vmem [shape: bf16[32,64], index: 1, kind: input, shape index: {}]
  %s2 = inlined_call_operand.vmem [shape: f32[1,64], index: 2, kind: input, shape index: {}]
  %s3 = inlined_call_operand.vmem [shape: bf16[64,128], index: 3, kind: input, shape index: {}]
  %s4 = inlined_call_operand.vmem [shape: f32[1,128], index: 4, kind: input, shape index: {}]
  %s5 = inlined_call_operand.vmem [shape: bf16[128,64], index: 5, kind: input, shape index: {}]
  %s6 = inlined_call_operand.vmem [shape: f32[1,64], index: 6, kind: input, shape index: {}]
  %s7 = inlined_call_operand.vmem [shape: bf16[64,8], index: 7, kind: input, shape index: {}]
  %s8 = inlined_call_operand.vmem [shape: f32[1,8], index: 8, kind: input, shape index: {}]
  %s9 = inlined_call_operand.vmem [shape: f32[200,8], index: 9, kind: output, shape index: {}]
  %s10 = sld [smem:[#allocation0]]
  $region117: #{tpu_custom_call.1} parent=0
    _
  %s12 = ssub.s32 1, %s10
  %s13 = scalar_select 0, %s12, %s10
  $region1: #{tpu_custom_call.1} parent=0
    #allocation2 [shape = 'u8[106496]{0}', space=vmem, size = 0x1a000, scoped, tag = 'output window, operand 0']
    loop: start=0, step=1, limit=4
    $region2: #{tpu_custom_call.1} parent=1 // loop_pre_header
      _
    $region3: #{tpu_custom_call.1} parent=1 // loop_header
      %s15 = sphi 0, %s19
      %p16 = scmp.ge.s32.totalorder %s15, 4
      %s25 = sphi 0, %s27
      %s28 = sphi 0, %s25
      %s29 = sphi 0, %s28
      %s45 = sphi 0, %s29
      %s49 = sphi 0, %s49
      %s51 = sphi 0, %s49
      %s52 = sphi 0, %s51
      %s66 = sphi 0, %s52
      %s70 = sphi 0, %s70
      %s72 = sphi 0, %s70
      %s73 = sphi 0, %s72
      %s87 = sphi 0, %s73
      %s91 = sphi 0, %s91
      %s93 = sphi 0, %s91
      %s94 = sphi 0, %s93
      %s108 = sphi 0, %s94
      %s112 = sphi 0, %s112
      %s114 = sphi 0, %s112
      %s115 = sphi 0, %s114
      %s129 = sphi 0, %s115
      %s133 = sphi 0, %s133
      %s135 = sphi 0, %s133
      %s136 = sphi 0, %s135
      %s150 = sphi 0, %s136
      %s154 = sphi 0, %s154
      %s156 = sphi 0, %s154
      %s157 = sphi 0, %s156
      %s171 = sphi 0, %s157
      %s175 = sphi 0, %s175
      %s177 = sphi 0, %s175
      %s178 = sphi 0, %s177
      %s192 = sphi 0, %s178
      %s196 = sphi 0, %s196
      %s198 = sphi 0, %s196
      %s199 = sphi 0, %s198
      %s213 = sphi 0, %s199
      %s219 = sphi 0, %s221
      %s222 = sphi 0, %s219
      %s223 = sphi 0, %s222
      %s239 = sphi 0, %s223
    $region4: #{tpu_custom_call.1} parent=1 // loop_header_branch
      %18 = sbr.rel (%p16) target = $region8
    $region5: #{tpu_custom_call.1} parent=1 // loop_body
      %s20 = ssub.s32 %s15, 1
      %s21 = ssub.s32 %s15, 2
      %s22 = sadd.s32 %s15, 1
      %s23 = ssub.s32 %s15, %s22
      %p24 = scmp.eq.s32.totalorder %s23, 0
      %s26 = sadd.s32 %s25, 1
      %s27 = scalar_select %p24, %s25, %s26
      %p30 = pneg %p24
      %p31 = scmp.eq.s32.totalorder %s15, 1
      %p32 = por %p30, %p31
      %p33 = scmp.ne.s32.totalorder %s25, %s28
      %p34 = scmp.eq.s32.totalorder %s15, 0
      %p35 = por %p33, %p34
      %p36 = scmp.ne.s32.totalorder %s25, %s28
      %p37 = scmp.eq.s32.totalorder %s20, 1
      %p38 = por %p36, %p37
      %p39 = scmp.ne.s32.totalorder %s28, %s29
      %p40 = scmp.eq.s32.totalorder %s20, 0
      %p41 = por %p39, %p40
      %p42 = scmp.ne.s32.totalorder %s28, %s29
      %p43 = scmp.eq.s32.totalorder %s21, 1
      %p44 = por %p42, %p43
      %p46 = scmp.ne.s32.totalorder %s29, %s45
      %p47 = scmp.eq.s32.totalorder %s21, 0
      %p48 = por %p46, %p47
      %s50 = sadd.s32 %s49, 1
      %p53 = scmp.eq.s32.totalorder %s15, 1
      %p54 = scmp.ne.s32.totalorder %s49, %s51
      %p55 = scmp.eq.s32.totalorder %s15, 0
      %p56 = por %p54, %p55
      %p57 = scmp.ne.s32.totalorder %s49, %s51
      %p58 = scmp.eq.s32.totalorder %s20, 1
      %p59 = por %p57, %p58
      %p60 = scmp.ne.s32.totalorder %s51, %s52
      %p61 = scmp.eq.s32.totalorder %s20, 0
      %p62 = por %p60, %p61
      %p63 = scmp.ne.s32.totalorder %s51, %s52
      %p64 = scmp.eq.s32.totalorder %s21, 1
      %p65 = por %p63, %p64
      %p67 = scmp.ne.s32.totalorder %s52, %s66
      %p68 = scmp.eq.s32.totalorder %s21, 0
      %p69 = por %p67, %p68
      %s71 = sadd.s32 %s70, 1
      %p74 = scmp.eq.s32.totalorder %s15, 1
      %p75 = scmp.ne.s32.totalorder %s70, %s72
      %p76 = scmp.eq.s32.totalorder %s15, 0
      %p77 = por %p75, %p76
      %p78 = scmp.ne.s32.totalorder %s70, %s72
      %p79 = scmp.eq.s32.totalorder %s20, 1
      %p80 = por %p78, %p79
      %p81 = scmp.ne.s32.totalorder %s72, %s73
      %p82 = scmp.eq.s32.totalorder %s20, 0
      %p83 = por %p81, %p82
      %p84 = scmp.ne.s32.totalorder %s72, %s73
      %p85 = scmp.eq.s32.totalorder %s21, 1
      %p86 = por %p84, %p85
      %p88 = scmp.ne.s32.totalorder %s73, %s87
      %p89 = scmp.eq.s32.totalorder %s21, 0
      %p90 = por %p88, %p89
      %s92 = sadd.s32 %s91, 1
      %p95 = scmp.eq.s32.totalorder %s15, 1
      %p96 = scmp.ne.s32.totalorder %s91, %s93
      %p97 = scmp.eq.s32.totalorder %s15, 0
      %p98 = por %p96, %p97
      %p99 = scmp.ne.s32.totalorder %s91, %s93
      %p100 = scmp.eq.s32.totalorder %s20, 1
      %p101 = por %p99, %p100
      %p102 = scmp.ne.s32.totalorder %s93, %s94
      %p103 = scmp.eq.s32.totalorder %s20, 0
      %p104 = por %p102, %p103
      %p105 = scmp.ne.s32.totalorder %s93, %s94
      %p106 = scmp.eq.s32.totalorder %s21, 1
      %p107 = por %p105, %p106
      %p109 = scmp.ne.s32.totalorder %s94, %s108
      %p110 = scmp.eq.s32.totalorder %s21, 0
      %p111 = por %p109, %p110
      %s113 = sadd.s32 %s112, 1
      %p116 = scmp.eq.s32.totalorder %s15, 1
      %p117 = scmp.ne.s32.totalorder %s112, %s114
      %p118 = scmp.eq.s32.totalorder %s15, 0
      %p119 = por %p117, %p118
      %p120 = scmp.ne.s32.totalorder %s112, %s114
      %p121 = scmp.eq.s32.totalorder %s20, 1
      %p122 = por %p120, %p121
      %p123 = scmp.ne.s32.totalorder %s114, %s115
      %p124 = scmp.eq.s32.totalorder %s20, 0
      %p125 = por %p123, %p124
      %p126 = scmp.ne.s32.totalorder %s114, %s115
      %p127 = scmp.eq.s32.totalorder %s21, 1
      %p128 = por %p126, %p127
      %p130 = scmp.ne.s32.totalorder %s115, %s129
      %p131 = scmp.eq.s32.totalorder %s21, 0
      %p132 = por %p130, %p131
      %s134 = sadd.s32 %s133, 1
      %p137 = scmp.eq.s32.totalorder %s15, 1
      %p138 = scmp.ne.s32.totalorder %s133, %s135
      %p139 = scmp.eq.s32.totalorder %s15, 0
      %p140 = por %p138, %p139
      %p141 = scmp.ne.s32.totalorder %s133, %s135
      %p142 = scmp.eq.s32.totalorder %s20, 1
      %p143 = por %p141, %p142
      %p144 = scmp.ne.s32.totalorder %s135, %s136
      %p145 = scmp.eq.s32.totalorder %s20, 0
      %p146 = por %p144, %p145
      %p147 = scmp.ne.s32.totalorder %s135, %s136
      %p148 = scmp.eq.s32.totalorder %s21, 1
      %p149 = por %p147, %p148
      %p151 = scmp.ne.s32.totalorder %s136, %s150
      %p152 = scmp.eq.s32.totalorder %s21, 0
      %p153 = por %p151, %p152
      %s155 = sadd.s32 %s154, 1
      %p158 = scmp.eq.s32.totalorder %s15, 1
      %p159 = scmp.ne.s32.totalorder %s154, %s156
      %p160 = scmp.eq.s32.totalorder %s15, 0
      %p161 = por %p159, %p160
      %p162 = scmp.ne.s32.totalorder %s154, %s156
      %p163 = scmp.eq.s32.totalorder %s20, 1
      %p164 = por %p162, %p163
      %p165 = scmp.ne.s32.totalorder %s156, %s157
      %p166 = scmp.eq.s32.totalorder %s20, 0
      %p167 = por %p165, %p166
      %p168 = scmp.ne.s32.totalorder %s156, %s157
      %p169 = scmp.eq.s32.totalorder %s21, 1
      %p170 = por %p168, %p169
      %p172 = scmp.ne.s32.totalorder %s157, %s171
      %p173 = scmp.eq.s32.totalorder %s21, 0
      %p174 = por %p172, %p173
      %s176 = sadd.s32 %s175, 1
      %p179 = scmp.eq.s32.totalorder %s15, 1
      %p180 = scmp.ne.s32.totalorder %s175, %s177
      %p181 = scmp.eq.s32.totalorder %s15, 0
      %p182 = por %p180, %p181
      %p183 = scmp.ne.s32.totalorder %s175, %s177
      %p184 = scmp.eq.s32.totalorder %s20, 1
      %p185 = por %p183, %p184
      %p186 = scmp.ne.s32.totalorder %s177, %s178
      %p187 = scmp.eq.s32.totalorder %s20, 0
      %p188 = por %p186, %p187
      %p189 = scmp.ne.s32.totalorder %s177, %s178
      %p190 = scmp.eq.s32.totalorder %s21, 1
      %p191 = por %p189, %p190
      %p193 = scmp.ne.s32.totalorder %s178, %s192
      %p194 = scmp.eq.s32.totalorder %s21, 0
      %p195 = por %p193, %p194
      %s197 = sadd.s32 %s196, 1
      %p200 = scmp.eq.s32.totalorder %s15, 1
      %p201 = scmp.ne.s32.totalorder %s196, %s198
      %p202 = scmp.eq.s32.totalorder %s15, 0
      %p203 = por %p201, %p202
      %p204 = scmp.ne.s32.totalorder %s196, %s198
      %p205 = scmp.eq.s32.totalorder %s20, 1
      %p206 = por %p204, %p205
      %p207 = scmp.ne.s32.totalorder %s198, %s199
      %p208 = scmp.eq.s32.totalorder %s20, 0
      %p209 = por %p207, %p208
      %p210 = scmp.ne.s32.totalorder %s198, %s199
      %p211 = scmp.eq.s32.totalorder %s21, 1
      %p212 = por %p210, %p211
      %p214 = scmp.ne.s32.totalorder %s199, %s213
      %p215 = scmp.eq.s32.totalorder %s21, 0
      %p216 = por %p214, %p215
      %s217 = ssub.s32 %s15, %s22
      %p218 = scmp.eq.s32.totalorder %s217, 0
      %s220 = sadd.s32 %s219, 1
      %s221 = scalar_select %p218, %s219, %s220
      %p224 = pneg %p218
      %p225 = scmp.eq.s32.totalorder %s15, 1
      %p226 = por %p224, %p225
      %p227 = scmp.ne.s32.totalorder %s219, %s222
      %p228 = scmp.eq.s32.totalorder %s15, 0
      %p229 = por %p227, %p228
      %p230 = scmp.ne.s32.totalorder %s219, %s222
      %p231 = scmp.eq.s32.totalorder %s20, 1
      %p232 = por %p230, %p231
      %p233 = scmp.ne.s32.totalorder %s222, %s223
      %p234 = scmp.eq.s32.totalorder %s20, 0
      %p235 = por %p233, %p234
      %p236 = scmp.ne.s32.totalorder %s222, %s223
      %p237 = scmp.eq.s32.totalorder %s21, 1
      %p238 = por %p236, %p237
      %p240 = scmp.ne.s32.totalorder %s223, %s239
      %p241 = scmp.eq.s32.totalorder %s21, 0
      %p242 = por %p240, %p241
      %p243 = scmp.le.s32.totalorder 1, %s15
      %p244 = scmp.lt.s32.totalorder %s15, 3
      %p245 = pnand %p243, %p244
      %p246 = pneg %p245
      // Predicated region
      $region9: #{tpu_custom_call.1} parent=5 // pred_check
        _
      $region10: #{tpu_custom_call.1} parent=5 // pred_check_branch
        %248 = sbr.rel (%p245) target = $region12
      $region11: #{tpu_custom_call.1} parent=5 // pred_region
        %s249 = ssub.s32 %s15, 1
        // Predicated region
        $region13: #{tpu_custom_call.1} parent=11 // pred_check
          %p250 = pneg %p62
        $region14: #{tpu_custom_call.1} parent=11 // pred_check_branch
          %252 = sbr.rel (%p250) target = $region16
        $region15: #{tpu_custom_call.1} parent=11 // pred_region
          _
        $region16: #{tpu_custom_call.1} parent=11 // pred_fallthru
          _
        // Predicated region
        $region17: #{tpu_custom_call.1} parent=11 // pred_check
          %p253 = pneg %p83
        $region18: #{tpu_custom_call.1} parent=11 // pred_check_branch
          %255 = sbr.rel (%p253) target = $region20
        $region19: #{tpu_custom_call.1} parent=11 // pred_region
          _
        $region20: #{tpu_custom_call.1} parent=11 // pred_fallthru
          _
        // Predicated region
        $region21: #{tpu_custom_call.1} parent=11 // pred_check
          %p256 = pneg %p104
        $region22: #{tpu_custom_call.1} parent=11 // pred_check_branch
          %258 = sbr.rel (%p256) target = $region24
        $region23: #{tpu_custom_call.1} parent=11 // pred_region
          _
        $region24: #{tpu_custom_call.1} parent=11 // pred_fallthru
          _
        // Predicated region
        $region25: #{tpu_custom_call.1} parent=11 // pred_check
          %p259 = pneg %p125
        $region26: #{tpu_custom_call.1} parent=11 // pred_check_branch
          %261 = sbr.rel (%p259) target = $region28
        $region27: #{tpu_custom_call.1} parent=11 // pred_region
          _
        $region28: #{tpu_custom_call.1} parent=11 // pred_fallthru
          _
        // Predicated region
        $region29: #{tpu_custom_call.1} parent=11 // pred_check
          %p262 = pneg %p146
        $region30: #{tpu_custom_call.1} parent=11 // pred_check_branch
          %264 = sbr.rel (%p262) target = $region32
        $region31: #{tpu_custom_call.1} parent=11 // pred_region
          _
        $region32: #{tpu_custom_call.1} parent=11 // pred_fallthru
          _
        // Predicated region
        $region33: #{tpu_custom_call.1} parent=11 // pred_check
          %p265 = pneg %p167
        $region34: #{tpu_custom_call.1} parent=11 // pred_check_branch
          %267 = sbr.rel (%p265) target = $region36
        $region35: #{tpu_custom_call.1} parent=11 // pred_region
          _
        $region36: #{tpu_custom_call.1} parent=11 // pred_fallthru
          _
        // Predicated region
        $region37: #{tpu_custom_call.1} parent=11 // pred_check
          %p268 = pneg %p188
        $region38: #{tpu_custom_call.1} parent=11 // pred_check_branch
          %270 = sbr.rel (%p268) target = $region40
        $region39: #{tpu_custom_call.1} parent=11 // pred_region
          _
        $region40: #{tpu_custom_call.1} parent=11 // pred_fallthru
          _
        // Predicated region
        $region41: #{tpu_custom_call.1} parent=11 // pred_check
          %p271 = pneg %p209
        $region42: #{tpu_custom_call.1} parent=11 // pred_check_branch
          %273 = sbr.rel (%p271) target = $region44
        $region43: #{tpu_custom_call.1} parent=11 // pred_region
          _
        $region44: #{tpu_custom_call.1} parent=11 // pred_fallthru
          _
      $region12: #{tpu_custom_call.1} parent=5 // pred_fallthru
        _
      %p274 = scmp.lt.s32.totalorder %s15, 2
      // Predicated region
      $region45: #{tpu_custom_call.1} parent=5 // pred_check
        %p275 = pneg %p274
      $region46: #{tpu_custom_call.1} parent=5 // pred_check_branch
        %277 = sbr.rel (%p275) target = $region48
      $region47: #{tpu_custom_call.1} parent=5 // pred_region
        // Predicated region
        $region49: #{tpu_custom_call.1} parent=47 // pred_check
          %p278 = pneg %p35
        $region50: #{tpu_custom_call.1} parent=47 // pred_check_branch
          %280 = sbr.rel (%p278) target = $region52
        $region51: #{tpu_custom_call.1} parent=47 // pred_region
          %s281 = smul.u32 13, %s15
          %s282 = ssub.s32 25, %s281
          %p283 = scmp.lt.s32.totalorder %s282, 13
          %s284 = scalar_select %p283, %s282, 13
          %s285 = smul.u32 4, %s284
          %p286 = scmp.lt.s32.totalorder %s281, 24
          %s287 = scalar_select %p286, %s281, 24
          %s288 = smul.addr %s287, 4
          %s289 = scalar_lea.vmem %s0, %s288
          %s290 = smul.u32 13, %s15
          %s291 = ssub.s32 25, %s290
          %p292 = scmp.lt.s32.totalorder %s291, 13
          %s293 = scalar_select %p292, %s291, 13
          %s294 = smul.u32 4, %s293
        $region52: #{tpu_custom_call.1} parent=47 // pred_fallthru
          _
      $region48: #{tpu_custom_call.1} parent=5 // pred_fallthru
        _
      %p295 = scmp.le.s32.totalorder 1, %s15
      %p296 = scmp.lt.s32.totalorder %s15, 3
      %p297 = pnand %p295, %p296
      %p298 = pneg %p297
      // Predicated region
      $region53: #{tpu_custom_call.1} parent=5 // pred_check
        _
      $region54: #{tpu_custom_call.1} parent=5 // pred_check_branch
        %300 = sbr.rel (%p297) target = $region56
      $region55: #{tpu_custom_call.1} parent=5 // pred_region
        %s301 = ssub.s32 %s15, 1
        %s302 = smul.u32 13, %s20
        %s303 = ssub.s32 25, %s302
        %p304 = scmp.lt.s32.totalorder %s303, 13
        %s305 = scalar_select %p304, %s303, 13
        %s306 = smul.u32 4, %s305
        %p307 = scmp.lt.s32.totalorder %s302, 24
        %s308 = scalar_select %p307, %s302, 24
        %s309 = smul.addr %s308, 4
        %s310 = scalar_lea.vmem %s0, %s309
        %p311 = pneg %p41
        %p312 = pneg %p38
        %p313 = pneg %p62
        %p314 = pneg %p59
        %p315 = pneg %p83
        %p316 = pneg %p80
        %p317 = pneg %p104
        %p318 = pneg %p101
        %p319 = pneg %p125
        %p320 = pneg %p122
        %p321 = pneg %p146
        %p322 = pneg %p143
        %p323 = pneg %p167
        %p324 = pneg %p164
        %p325 = pneg %p188
        %p326 = pneg %p185
        %p327 = pneg %p209
        %p328 = pneg %p206
        %p329 = pneg %p235
        %p330 = pneg %p232
        %s331 = sand.u32 %s222, 1
        %s332 = sand.u32 %s222, 1
        %s333 = smul.addr %s332, 104
        %s334 = scalar_lea.vmem [#allocation2], %s333
        %s335 = smul.u32 13, %s20
        %s336 = ssub.s32 25, %s335
        %p337 = scmp.lt.s32.totalorder %s336, 13
        %s338 = scalar_select %p337, %s336, 13
        %s339 = smul.u32 4, %s338
        %p340 = scmp.lt.s32.totalorder %s335, 24
        %s341 = scalar_select %p340, %s335, 24
        %s342 = smul.addr %s341, 4
        %s343 = scalar_lea.vmem %s0, %s342
        %s344 = smul.u32 13, %s20
        %s345 = ssub.s32 25, %s344
        %p346 = scmp.lt.s32.totalorder %s345, 13
        %s347 = scalar_select %p346, %s345, 13
        %s348 = smul.u32 4, %s347
        %s349 = smul.u32 13, %s20
        %s350 = ssub.s32 25, %s349
        %p351 = scmp.lt.s32.totalorder %s350, 13
        %s352 = scalar_select %p351, %s350, 13
        %s353 = smul.u32 8, %s352
        %v355 = vld [vmem:[%s343] sm:$0xf]
        %v356 = vld [vmem:[%s343 + $0x4] sm:$0xf]
        %v357 = vld [vmem:[%s343 + $0x8] sm:$0xf]
        %v358 = vld [vmem:[%s343 + $0xc] sm:$0xf]
        %v359 = vld [vmem:[%s343 + $0x10] sm:$0xf]
        %v360 = vld [vmem:[%s343 + $0x14] sm:$0xf]
        %v361 = vld [vmem:[%s343 + $0x18] sm:$0xf]
        %v362 = vld [vmem:[%s343 + $0x1c] sm:$0xf]
        %v363 = vld [vmem:[%s343 + $0x20] sm:$0xf]
        %v364 = vld [vmem:[%s343 + $0x24] sm:$0xf]
        %v365 = vld [vmem:[%s343 + $0x28] sm:$0xf]
        %v366 = vld [vmem:[%s343 + $0x2c] sm:$0xf]
        %v367 = vld [vmem:[%s343 + $0x30] sm:$0xf]
        %v368 = vld [vmem:[%s1] sm:$0xf]
        %v369 = vld [vmem:[%s1 + $0x4] sm:$0xf]
        %v370 = vld [vmem:[%s1 + $0x8] sm:$0xf]
        %v371 = vld [vmem:[%s1 + $0xc] sm:$0xf]
        %v372 = vld [vmem:[%s2] sm:$0x1]
        %v374 = vperm.slane %v372, 0
        %v389 = vunpack.c.l.b16 %v355
        %v390 = vunpack.c.l.b16 %v356
        %v391 = vunpack.c.l.b16 %v357
        %v392 = vunpack.c.l.b16 %v358
        %v393 = vunpack.c.l.b16 %v359
        %v394 = vunpack.c.l.b16 %v360
        %v395 = vunpack.c.l.b16 %v361
        %v396 = vunpack.c.l.b16 %v362
        %v397 = vunpack.c.l.b16 %v363
        %v398 = vunpack.c.l.b16 %v364
        %v399 = vunpack.c.l.b16 %v365
        %v400 = vunpack.c.l.b16 %v366
        %v401 = vunpack.c.l.b16 %v367
        %v402 = vpack.c.b16 %v390, %v389
        %v403 = vpack.c.b16 %v392, %v391
        %v404 = vpack.c.b16 %v394, %v393
        %v405 = vpack.c.b16 %v396, %v395
        %v406 = vpack.c.b16 %v398, %v397
        %v407 = vpack.c.b16 %v400, %v399
        %v408 = vpack.c.b16 %v401, %v401
        %v413 = vunpack.c.l.b16 %v368
        %v414 = vunpack.c.l.b16 %v369
        %v415 = vunpack.c.l.b16 %v370
        %v416 = vunpack.c.l.b16 %v371
        %v417 = vpack.c.b16 %v414, %v413
        %v418 = vpack.c.b16 %v416, %v415
        %vm421 = vcmask 261120
        %v423 = vsel %vm421, %v402, 0
        %v426 = vsel %vm421, %v403, 0
        %v429 = vsel %vm421, %v404, 0
        %v432 = vsel %vm421, %v405, 0
        %v435 = vsel %vm421, %v406, 0
        %v438 = vsel %vm421, %v407, 0
        %v441 = vsel %vm421, %v408, 0
        %443 = vmatpush.bf16.msra.mxu0 0
        %444 = vmatpush.bf16.msra.mxu0 0
        %445 = vmatpush.bf16.msra.mxu0 0
        %446 = vmatpush.bf16.msra.mxu0 0
        %447 = vmatpush.bf16.msra.mxu0 0
        %448 = vmatpush.bf16.msra.mxu0 0
        %449 = vmatpush.bf16.msra.mxu0 %v418
        %450 = vmatpush.bf16.msra.mxu0 %v417
        %451 = vmatmul.bf16.gmra.mxu0 %v423
        %v452 = vpop.f32.mrf.mxu0
        %v453 = vadd.f32 %v374, %v452
        %v454 = vpop.f32.mrf.mxu0
        %v455 = vadd.f32 %v374, %v454
        %456 = vmatmul.bf16.gmra.mxu0 %v426
        %v457 = vpop.f32.mrf.mxu0
        %v458 = vadd.f32 %v374, %v457
        %v459 = vpop.f32.mrf.mxu0
        %v460 = vadd.f32 %v374, %v459
        %461 = vmatmul.bf16.gmra.mxu0 %v429
        %v462 = vpop.f32.mrf.mxu0
        %v463 = vadd.f32 %v374, %v462
        %v464 = vpop.f32.mrf.mxu0
        %v465 = vadd.f32 %v374, %v464
        %466 = vmatmul.bf16.gmra.mxu0 %v432
        %v467 = vpop.f32.mrf.mxu0
        %v468 = vadd.f32 %v374, %v467
        %v469 = vpop.f32.mrf.mxu0
        %v470 = vadd.f32 %v374, %v469
        %471 = vmatmul.bf16.gmra.mxu0 %v435
        %v472 = vpop.f32.mrf.mxu0
        %v473 = vadd.f32 %v374, %v472
        %v474 = vpop.f32.mrf.mxu0
        %v475 = vadd.f32 %v374, %v474
        %476 = vmatmul.bf16.gmra.mxu0 %v438
        %v477 = vpop.f32.mrf.mxu0
        %v478 = vadd.f32 %v374, %v477
        %v479 = vpop.f32.mrf.mxu0
        %v480 = vadd.f32 %v374, %v479
        %481 = vmatmul.bf16.gmra.mxu0 %v441
        %v482 = vpop.f32.mrf.mxu0
        %v483 = vadd.f32 %v374, %v482
        %v484 = vpop.f32.mrf.mxu0
        %485 = vdwg.mxu0
        %v486 = vmul.f32 %v453, 0.02
        %v487 = vmul.f32 %v455, 0.02
        %v488 = vmul.f32 %v458, 0.02
        %v489 = vmul.f32 %v460, 0.02
        %v490 = vmul.f32 %v463, 0.02
        %v491 = vmul.f32 %v465, 0.02
        %v492 = vmul.f32 %v468, 0.02
        %v493 = vmul.f32 %v470, 0.02
        %v494 = vmul.f32 %v473, 0.02
        %v495 = vmul.f32 %v475, 0.02
        %v496 = vmul.f32 %v478, 0.02
        %v497 = vmul.f32 %v480, 0.02
        %v498 = vmul.f32 %v483, 0.02
        %v499 = vmax.f32 %v453, %v486
        %v500 = vmax.f32 %v455, %v487
        %v501 = vmax.f32 %v458, %v488
        %v502 = vmax.f32 %v460, %v489
        %v503 = vmax.f32 %v463, %v490
        %v504 = vmax.f32 %v465, %v491
        %v505 = vmax.f32 %v468, %v492
        %v506 = vmax.f32 %v470, %v493
        %v507 = vmax.f32 %v473, %v494
        %v508 = vmax.f32 %v475, %v495
        %v509 = vmax.f32 %v478, %v496
        %v510 = vmax.f32 %v480, %v497
        %v511 = vmax.f32 %v483, %v498
        %v512 = vpack.c.bf16 %v500, %v499
        %v513 = vpack.c.bf16 %v502, %v501
        %v514 = vpack.c.bf16 %v504, %v503
        %v515 = vpack.c.bf16 %v506, %v505
        %v516 = vpack.c.bf16 %v508, %v507
        %v517 = vpack.c.bf16 %v510, %v509
        %v518 = vpack.c.bf16 %v511, %v511
        %v519 = vld [vmem:[%s3] sm:$0xf]
        %v520 = vld [vmem:[%s3 + $0x4] sm:$0xf]
        %v521 = vld [vmem:[%s3 + $0x8] sm:$0xf]
        %v522 = vld [vmem:[%s3 + $0xc] sm:$0xf]
        %v523 = vld [vmem:[%s3 + $0x10] sm:$0xf]
        %v524 = vld [vmem:[%s3 + $0x14] sm:$0xf]
        %v525 = vld [vmem:[%s3 + $0x18] sm:$0xf]
        %v526 = vld [vmem:[%s3 + $0x1c] sm:$0xf]
        %v527 = vld [vmem:[%s4] sm:$0x1]
        %v529 = vperm.slane %v527, 0
        %v539 = vunpack.c.l.b16 %v519
        %v540 = vunpack.c.l.b16 %v520
        %v541 = vunpack.c.l.b16 %v521
        %v542 = vunpack.c.l.b16 %v522
        %v543 = vunpack.c.l.b16 %v523
        %v544 = vunpack.c.l.b16 %v524
        %v545 = vunpack.c.l.b16 %v525
        %v546 = vunpack.c.l.b16 %v526
        %v547 = vpack.c.b16 %v540, %v539
        %v548 = vpack.c.b16 %v542, %v541
        %v549 = vpack.c.b16 %v544, %v543
        %v550 = vpack.c.b16 %v546, %v545
        %vm555 = vcmask 523264
        %v557 = vsel %vm555, %v512, 0
        %v560 = vsel %vm555, %v513, 0
        %v563 = vsel %vm555, %v514, 0
        %v566 = vsel %vm555, %v515, 0
        %v569 = vsel %vm555, %v516, 0
        %v572 = vsel %vm555, %v517, 0
        %v575 = vsel %vm555, %v518, 0
        %577 = vmatpush.bf16.msra.mxu0 0
        %578 = vmatpush.bf16.msra.mxu0 0
        %579 = vmatpush.bf16.msra.mxu0 0
        %580 = vmatpush.bf16.msra.mxu0 0
        %581 = vmatpush.bf16.msra.mxu0 %v550
        %582 = vmatpush.bf16.msra.mxu0 %v549
        %583 = vmatpush.bf16.msra.mxu0 %v548
        %584 = vmatpush.bf16.msra.mxu0 %v547
        %585 = vmatmul.bf16.gmra.mxu0 %v557
        %v586 = vpop.f32.mrf.mxu0
        %v587 = vadd.f32 %v529, %v586
        %v588 = vpop.f32.mrf.mxu0
        %v589 = vadd.f32 %v529, %v588
        %590 = vmatmul.bf16.gmra.mxu0 %v560
        %v591 = vpop.f32.mrf.mxu0
        %v592 = vadd.f32 %v529, %v591
        %v593 = vpop.f32.mrf.mxu0
        %v594 = vadd.f32 %v529, %v593
        %595 = vmatmul.bf16.gmra.mxu0 %v563
        %v596 = vpop.f32.mrf.mxu0
        %v597 = vadd.f32 %v529, %v596
        %v598 = vpop.f32.mrf.mxu0
        %v599 = vadd.f32 %v529, %v598
        %600 = vmatmul.bf16.gmra.mxu0 %v566
        %v601 = vpop.f32.mrf.mxu0
        %v602 = vadd.f32 %v529, %v601
        %v603 = vpop.f32.mrf.mxu0
        %v604 = vadd.f32 %v529, %v603
        %605 = vmatmul.bf16.gmra.mxu0 %v569
        %v606 = vpop.f32.mrf.mxu0
        %v607 = vadd.f32 %v529, %v606
        %v608 = vpop.f32.mrf.mxu0
        %v609 = vadd.f32 %v529, %v608
        %610 = vmatmul.bf16.gmra.mxu0 %v572
        %v611 = vpop.f32.mrf.mxu0
        %v612 = vadd.f32 %v529, %v611
        %v613 = vpop.f32.mrf.mxu0
        %v614 = vadd.f32 %v529, %v613
        %615 = vmatmul.bf16.gmra.mxu0 %v575
        %v616 = vpop.f32.mrf.mxu0
        %v617 = vadd.f32 %v529, %v616
        %v618 = vpop.f32.mrf.mxu0
        %619 = vdwg.mxu0
        %v620 = vmul.f32 %v587, 0.02
        %v621 = vmul.f32 %v589, 0.02
        %v622 = vmul.f32 %v592, 0.02
        %v623 = vmul.f32 %v594, 0.02
        %v624 = vmul.f32 %v597, 0.02
        %v625 = vmul.f32 %v599, 0.02
        %v626 = vmul.f32 %v602, 0.02
        %v627 = vmul.f32 %v604, 0.02
        %v628 = vmul.f32 %v607, 0.02
        %v629 = vmul.f32 %v609, 0.02
        %v630 = vmul.f32 %v612, 0.02
        %v631 = vmul.f32 %v614, 0.02
        %v632 = vmul.f32 %v617, 0.02
        %v633 = vmax.f32 %v587, %v620
        %v634 = vmax.f32 %v589, %v621
        %v635 = vmax.f32 %v592, %v622
        %v636 = vmax.f32 %v594, %v623
        %v637 = vmax.f32 %v597, %v624
        %v638 = vmax.f32 %v599, %v625
        %v639 = vmax.f32 %v602, %v626
        %v640 = vmax.f32 %v604, %v627
        %v641 = vmax.f32 %v607, %v628
        %v642 = vmax.f32 %v609, %v629
        %v643 = vmax.f32 %v612, %v630
        %v644 = vmax.f32 %v614, %v631
        %v645 = vmax.f32 %v617, %v632
        %v646 = vpack.c.bf16 %v634, %v633
        %v647 = vpack.c.bf16 %v636, %v635
        %v648 = vpack.c.bf16 %v638, %v637
        %v649 = vpack.c.bf16 %v640, %v639
        %v650 = vpack.c.bf16 %v642, %v641
        %v651 = vpack.c.bf16 %v644, %v643
        %v652 = vpack.c.bf16 %v645, %v645
        %v653 = vld [vmem:[%s5] sm:$0xf]
        %v654 = vld [vmem:[%s5 + $0x4] sm:$0xf]
        %v655 = vld [vmem:[%s5 + $0x8] sm:$0xf]
        %v656 = vld [vmem:[%s5 + $0xc] sm:$0xf]
        %v657 = vld [vmem:[%s5 + $0x10] sm:$0xf]
        %v658 = vld [vmem:[%s5 + $0x14] sm:$0xf]
        %v659 = vld [vmem:[%s5 + $0x18] sm:$0xf]
        %v660 = vld [vmem:[%s5 + $0x1c] sm:$0xf]
        %v661 = vld [vmem:[%s5 + $0x20] sm:$0xf]
        %v662 = vld [vmem:[%s5 + $0x24] sm:$0xf]
        %v663 = vld [vmem:[%s5 + $0x28] sm:$0xf]
        %v664 = vld [vmem:[%s5 + $0x2c] sm:$0xf]
        %v665 = vld [vmem:[%s5 + $0x30] sm:$0xf]
        %v666 = vld [vmem:[%s5 + $0x34] sm:$0xf]
        %v667 = vld [vmem:[%s5 + $0x38] sm:$0xf]
        %v668 = vld [vmem:[%s5 + $0x3c] sm:$0xf]
        %v669 = vld [vmem:[%s6] sm:$0x1]
        %v671 = vperm.slane %v669, 0
        %v689 = vunpack.c.l.b16 %v653
        %v690 = vunpack.c.l.b16 %v654
        %v691 = vunpack.c.l.b16 %v655
        %v692 = vunpack.c.l.b16 %v656
        %v693 = vunpack.c.l.b16 %v657
        %v694 = vunpack.c.l.b16 %v658
        %v695 = vunpack.c.l.b16 %v659
        %v696 = vunpack.c.l.b16 %v660
        %v697 = vunpack.c.l.b16 %v661
        %v698 = vunpack.c.l.b16 %v662
        %v699 = vunpack.c.l.b16 %v663
        %v700 = vunpack.c.l.b16 %v664
        %v701 = vunpack.c.l.b16 %v665
        %v702 = vunpack.c.l.b16 %v666
        %v703 = vunpack.c.l.b16 %v667
        %v704 = vunpack.c.l.b16 %v668
        %v705 = vpack.c.b16 %v690, %v689
        %v706 = vpack.c.b16 %v692, %v691
        %v707 = vpack.c.b16 %v694, %v693
        %v708 = vpack.c.b16 %v696, %v695
        %v709 = vpack.c.b16 %v698, %v697
        %v710 = vpack.c.b16 %v700, %v699
        %v711 = vpack.c.b16 %v702, %v701
        %v712 = vpack.c.b16 %v704, %v703
        %721 = vmatpush.bf16.msra.mxu0 %v712
        %722 = vmatpush.bf16.msra.mxu0 %v711
        %723 = vmatpush.bf16.msra.mxu0 %v710
        %724 = vmatpush.bf16.msra.mxu0 %v709
        %725 = vmatpush.bf16.msra.mxu0 %v708
        %726 = vmatpush.bf16.msra.mxu0 %v707
        %727 = vmatpush.bf16.msra.mxu0 %v706
        %728 = vmatpush.bf16.msra.mxu0 %v705
        %729 = vmatmul.bf16.gmra.mxu0 %v646
        %v730 = vpop.f32.mrf.mxu0
        %v731 = vadd.f32 %v671, %v730
        %v732 = vpop.f32.mrf.mxu0
        %v733 = vadd.f32 %v671, %v732
        %734 = vmatmul.bf16.gmra.mxu0 %v647
        %v735 = vpop.f32.mrf.mxu0
        %v736 = vadd.f32 %v671, %v735
        %v737 = vpop.f32.mrf.mxu0
        %v738 = vadd.f32 %v671, %v737
        %739 = vmatmul.bf16.gmra.mxu0 %v648
        %v740 = vpop.f32.mrf.mxu0
        %v741 = vadd.f32 %v671, %v740
        %v742 = vpop.f32.mrf.mxu0
        %v743 = vadd.f32 %v671, %v742
        %744 = vmatmul.bf16.gmra.mxu0 %v649
        %v745 = vpop.f32.mrf.mxu0
        %v746 = vadd.f32 %v671, %v745
        %v747 = vpop.f32.mrf.mxu0
        %v748 = vadd.f32 %v671, %v747
        %749 = vmatmul.bf16.gmra.mxu0 %v650
        %v750 = vpop.f32.mrf.mxu0
        %v751 = vadd.f32 %v671, %v750
        %v752 = vpop.f32.mrf.mxu0
        %v753 = vadd.f32 %v671, %v752
        %754 = vmatmul.bf16.gmra.mxu0 %v651
        %v755 = vpop.f32.mrf.mxu0
        %v756 = vadd.f32 %v671, %v755
        %v757 = vpop.f32.mrf.mxu0
        %v758 = vadd.f32 %v671, %v757
        %759 = vmatmul.bf16.gmra.mxu0 %v652
        %v760 = vpop.f32.mrf.mxu0
        %v761 = vadd.f32 %v671, %v760
        %v762 = vpop.f32.mrf.mxu0
        %763 = vdwg.mxu0
        %v764 = vmul.f32 %v731, 0.02
        %v765 = vmul.f32 %v733, 0.02
        %v766 = vmul.f32 %v736, 0.02
        %v767 = vmul.f32 %v738, 0.02
        %v768 = vmul.f32 %v741, 0.02
        %v769 = vmul.f32 %v743, 0.02
        %v770 = vmul.f32 %v746, 0.02
        %v771 = vmul.f32 %v748, 0.02
        %v772 = vmul.f32 %v751, 0.02
        %v773 = vmul.f32 %v753, 0.02
        %v774 = vmul.f32 %v756, 0.02
        %v775 = vmul.f32 %v758, 0.02
        %v776 = vmul.f32 %v761, 0.02
        %v777 = vmax.f32 %v731, %v764
        %v778 = vmax.f32 %v733, %v765
        %v779 = vmax.f32 %v736, %v766
        %v780 = vmax.f32 %v738, %v767
        %v781 = vmax.f32 %v741, %v768
        %v782 = vmax.f32 %v743, %v769
        %v783 = vmax.f32 %v746, %v770
        %v784 = vmax.f32 %v748, %v771
        %v785 = vmax.f32 %v751, %v772
        %v786 = vmax.f32 %v753, %v773
        %v787 = vmax.f32 %v756, %v774
        %v788 = vmax.f32 %v758, %v775
        %v789 = vmax.f32 %v761, %v776
        %v790 = vpack.c.bf16 %v778, %v777
        %v791 = vpack.c.bf16 %v780, %v779
        %v792 = vpack.c.bf16 %v782, %v781
        %v793 = vpack.c.bf16 %v784, %v783
        %v794 = vpack.c.bf16 %v786, %v785
        %v795 = vpack.c.bf16 %v788, %v787
        %v796 = vpack.c.bf16 %v789, %v789
        %v797 = vld [vmem:[%s7] sm:$0xf]
        %v798 = vld [vmem:[%s7 + $0x4] sm:$0xf]
        %v799 = vld [vmem:[%s7 + $0x8] sm:$0xf]
        %v800 = vld [vmem:[%s7 + $0xc] sm:$0xf]
        %v801 = vld [vmem:[%s7 + $0x10] sm:$0xf]
        %v802 = vld [vmem:[%s7 + $0x14] sm:$0xf]
        %v803 = vld [vmem:[%s7 + $0x18] sm:$0xf]
        %v804 = vld [vmem:[%s7 + $0x1c] sm:$0xf]
        %v805 = vld [vmem:[%s8] sm:$0x1]
        %v807 = vperm.slane %v805, 0
        %v817 = vunpack.c.l.b16 %v797
        %v818 = vunpack.c.l.b16 %v798
        %v819 = vunpack.c.l.b16 %v799
        %v820 = vunpack.c.l.b16 %v800
        %v821 = vunpack.c.l.b16 %v801
        %v822 = vunpack.c.l.b16 %v802
        %v823 = vunpack.c.l.b16 %v803
        %v824 = vunpack.c.l.b16 %v804
        %v825 = vpack.c.b16 %v818, %v817
        %v826 = vpack.c.b16 %v820, %v819
        %v827 = vpack.c.b16 %v822, %v821
        %v828 = vpack.c.b16 %v824, %v823
        %v834 = vsel %vm555, %v790, 0
        %v837 = vsel %vm555, %v791, 0
        %v840 = vsel %vm555, %v792, 0
        %v843 = vsel %vm555, %v793, 0
        %v846 = vsel %vm555, %v794, 0
        %v849 = vsel %vm555, %v795, 0
        %v852 = vsel %vm555, %v796, 0
        %854 = vmatpush.bf16.msra.mxu0 0
        %855 = vmatpush.bf16.msra.mxu0 0
        %856 = vmatpush.bf16.msra.mxu0 0
        %857 = vmatpush.bf16.msra.mxu0 0
        %858 = vmatpush.bf16.msra.mxu0 %v828
        %859 = vmatpush.bf16.msra.mxu0 %v827
        %860 = vmatpush.bf16.msra.mxu0 %v826
        %861 = vmatpush.bf16.msra.mxu0 %v825
        %862 = vmatmul.bf16.gmra.mxu0 %v834
        %v863 = vpop.f32.mrf.mxu0
        %v864 = vadd.f32 %v807, %v863
        %v865 = vpop.f32.mrf.mxu0
        %v866 = vadd.f32 %v807, %v865
        %867 = vmatmul.bf16.gmra.mxu0 %v837
        %v868 = vpop.f32.mrf.mxu0
        %v869 = vadd.f32 %v807, %v868
        %v870 = vpop.f32.mrf.mxu0
        %v871 = vadd.f32 %v807, %v870
        %872 = vmatmul.bf16.gmra.mxu0 %v840
        %v873 = vpop.f32.mrf.mxu0
        %v874 = vadd.f32 %v807, %v873
        %v875 = vpop.f32.mrf.mxu0
        %v876 = vadd.f32 %v807, %v875
        %877 = vmatmul.bf16.gmra.mxu0 %v843
        %v878 = vpop.f32.mrf.mxu0
        %v879 = vadd.f32 %v807, %v878
        %v880 = vpop.f32.mrf.mxu0
        %v881 = vadd.f32 %v807, %v880
        %882 = vmatmul.bf16.gmra.mxu0 %v846
        %v883 = vpop.f32.mrf.mxu0
        %v884 = vadd.f32 %v807, %v883
        %v885 = vpop.f32.mrf.mxu0
        %v886 = vadd.f32 %v807, %v885
        %887 = vmatmul.bf16.gmra.mxu0 %v849
        %v888 = vpop.f32.mrf.mxu0
        %v889 = vadd.f32 %v807, %v888
        %v890 = vpop.f32.mrf.mxu0
        %v891 = vadd.f32 %v807, %v890
        %892 = vmatmul.bf16.gmra.mxu0 %v852
        %v893 = vpop.f32.mrf.mxu0
        %v894 = vadd.f32 %v807, %v893
        %v895 = vpop.f32.mrf.mxu0
        %896 = vdwg.mxu0
        %vm897 = vcmask 64512
        %898 = vst.msk [vmem:[%s334] sm:$0xff] %vm897, %v864
        %899 = vst.msk [vmem:[%s334 + $0x8] sm:$0xff] %vm897, %v866
        %900 = vst.msk [vmem:[%s334 + $0x10] sm:$0xff] %vm897, %v869
        %901 = vst.msk [vmem:[%s334 + $0x18] sm:$0xff] %vm897, %v871
        %902 = vst.msk [vmem:[%s334 + $0x20] sm:$0xff] %vm897, %v874
        %903 = vst.msk [vmem:[%s334 + $0x28] sm:$0xff] %vm897, %v876
        %904 = vst.msk [vmem:[%s334 + $0x30] sm:$0xff] %vm897, %v879
        %905 = vst.msk [vmem:[%s334 + $0x38] sm:$0xff] %vm897, %v881
        %906 = vst.msk [vmem:[%s334 + $0x40] sm:$0xff] %vm897, %v884
        %907 = vst.msk [vmem:[%s334 + $0x48] sm:$0xff] %vm897, %v886
        %908 = vst.msk [vmem:[%s334 + $0x50] sm:$0xff] %vm897, %v889
        %909 = vst.msk [vmem:[%s334 + $0x58] sm:$0xff] %vm897, %v891
        %910 = vst.msk [vmem:[%s334 + $0x60] sm:$0xff] %vm897, %v894
        %s911 = sand.u32 %s222, 1
        %s912 = sand.u32 %s222, 1
        %s913 = smul.addr %s912, 104
        %s914 = scalar_lea.vmem [#allocation2], %s913
        // Predicated region
        $region57: #{tpu_custom_call.1} parent=55 // pred_check
          %p915 = pneg %p232
        $region58: #{tpu_custom_call.1} parent=55 // pred_check_branch
          %917 = sbr.rel (%p915) target = $region60
        $region59: #{tpu_custom_call.1} parent=55 // pred_region
          %s918 = smul.u32 13, %s20
          %s919 = ssub.s32 25, %s918
          %p920 = scmp.lt.s32.totalorder %s919, 13
          %s921 = scalar_select %p920, %s919, 13
          %s922 = smul.u32 8, %s921
          %p923 = scmp.ne.s32.totalorder 0, %s922
          %s924 = smul.addr %s918, 8
          %s925 = scalar_lea.vmem %s9, %s924
          // Predicated region
          $region61: #{tpu_custom_call.1} parent=59 // pred_check
            %p926 = pneg %p923
          $region62: #{tpu_custom_call.1} parent=59 // pred_check_branch
            %928 = sbr.rel (%p926) target = $region64
          $region63: #{tpu_custom_call.1} parent=59 // pred_region
            // Predicated region
            $region65: #{tpu_custom_call.1} parent=63 // pred_check
              _
            $region66: #{tpu_custom_call.1} parent=63 // pred_check_branch
              %930 = sbr.rel (0) target = $region68
            $region67: #{tpu_custom_call.1} parent=63 // pred_region
              // Predicated region
              $region87: #{tpu_custom_call.1} parent=67 // pred_check
                _
              $region88: #{tpu_custom_call.1} parent=67 // pred_check_branch
                %1005 = sbr.rel (0) target = $region90
              $region89: #{tpu_custom_call.1} parent=67 // pred_region
                %s1006 = sdiv.u32.pop %s921, 13
                %s1007 = srem.u32.pop %s921, 13
                // While loop
                $region91: #{tpu_custom_call.1} parent=89 // loop_pre_header
                  _
                $region92: #{tpu_custom_call.1} parent=89 // loop_header
                  %s1009 = sphi 0, %s1011
                  %p1010 = scmp.ge.s32.totalorder %s1009, %s1006
                  %s1014 = sphi 0, %s1045
                  %s1015 = sphi %s914, %s1048
                  %s1016 = sphi %s925, %s1049
                $region93: #{tpu_custom_call.1} parent=89 // loop_header_branch
                  %1013 = sbr.rel (%p1010) target = $region97
                $region94: #{tpu_custom_call.1} parent=89 // loop_body
                  %v1017 = vld [vmem:[%s1015] sm:$0xff]
                  %1018 = vst [vmem:[%s1016] sm:$0xff] %v1017
                  %v1019 = vld [vmem:[%s1015 + $0x8] sm:$0xff]
                  %1020 = vst [vmem:[%s1016 + $0x8] sm:$0xff] %v1019
                  %v1021 = vld [vmem:[%s1015 + $0x10] sm:$0xff]
                  %1022 = vst [vmem:[%s1016 + $0x10] sm:$0xff] %v1021
                  %v1023 = vld [vmem:[%s1015 + $0x18] sm:$0xff]
                  %1024 = vst [vmem:[%s1016 + $0x18] sm:$0xff] %v1023
                  %v1025 = vld [vmem:[%s1015 + $0x20] sm:$0xff]
                  %1026 = vst [vmem:[%s1016 + $0x20] sm:$0xff] %v1025
                  %v1027 = vld [vmem:[%s1015 + $0x28] sm:$0xff]
                  %1028 = vst [vmem:[%s1016 + $0x28] sm:$0xff] %v1027
                  %v1029 = vld [vmem:[%s1015 + $0x30] sm:$0xff]
                  %1030 = vst [vmem:[%s1016 + $0x30] sm:$0xff] %v1029
                  %v1031 = vld [vmem:[%s1015 + $0x38] sm:$0xff]
                  %1032 = vst [vmem:[%s1016 + $0x38] sm:$0xff] %v1031
                  %v1033 = vld [vmem:[%s1015 + $0x40] sm:$0xff]
                  %1034 = vst [vmem:[%s1016 + $0x40] sm:$0xff] %v1033
                  %v1035 = vld [vmem:[%s1015 + $0x48] sm:$0xff]
                  %1036 = vst [vmem:[%s1016 + $0x48] sm:$0xff] %v1035
                  %v1037 = vld [vmem:[%s1015 + $0x50] sm:$0xff]
                  %1038 = vst [vmem:[%s1016 + $0x50] sm:$0xff] %v1037
                  %v1039 = vld [vmem:[%s1015 + $0x58] sm:$0xff]
                  %1040 = vst [vmem:[%s1016 + $0x58] sm:$0xff] %v1039
                  %v1041 = vld [vmem:[%s1015 + $0x60] sm:$0xff]
                  %1042 = vst [vmem:[%s1016 + $0x60] sm:$0xff] %v1041
                  %s1043 = sadd.s32 1, %s1014
                  %p1044 = scmp.ge.s32.totalorder %s1043, %s1006
                  %s1045 = scalar_select %p1044, 0, %s1043
                  %s1046 = smul.u32 %s1045, 104
                  %s1047 = smul.u32 %s1045, 104
                  %s1048 = scalar_lea.vmem %s914, %s1046 [#allocation2]
                  %s1049 = scalar_lea.vmem %s925, %s1047
                $region95: #{tpu_custom_call.1} parent=89 // loop_footer
                  %s1011 = sadd.s32 %s1009, 1
                $region96: #{tpu_custom_call.1} parent=89 // loop_footer_branch
                  %1008 = sbr.rel target = $region92
                $region97: #{tpu_custom_call.1} parent=89 // loop_exit
                  _
                %s1050 = sdiv.u32.pop %s921, 13
                %s1051 = srem.u32.pop %s921, 13
                %s1052 = smul.u32 %s1050, 13
                %s1053 = smul.u32 8, %s1052
                %s1054 = scalar_lea.vmem %s914, %s1053 [#allocation2]
                %s1055 = smul.u32 8, %s1052
                %s1056 = scalar_lea.vmem %s925, %s1055
                // While loop
                $region98: #{tpu_custom_call.1} parent=89 // loop_pre_header
                  _
                $region99: #{tpu_custom_call.1} parent=89 // loop_header
                  %s1058 = sphi 0, %s1060
                  %p1059 = scmp.ge.s32.totalorder %s1058, %s1051
                  %s1063 = sphi 0, %s1070
                  %s1064 = sphi %s1054, %s1073
                  %s1065 = sphi %s1056, %s1074
                $region100: #{tpu_custom_call.1} parent=89 // loop_header_branch
                  %1062 = sbr.rel (%p1059) target = $region104
                $region101: #{tpu_custom_call.1} parent=89 // loop_body
                  %v1066 = vld [vmem:[%s1064] sm:$0xff]
                  %1067 = vst [vmem:[%s1065] sm:$0xff] %v1066
                  %s1068 = sadd.s32 1, %s1063
                  %p1069 = scmp.ge.s32.totalorder %s1068, %s1051
                  %s1070 = scalar_select %p1069, 0, %s1068
                  %s1071 = smul.u32 %s1070, 8
                  %s1072 = smul.u32 %s1070, 8
                  %s1073 = scalar_lea.vmem %s1054, %s1071 [#allocation2]
                  %s1074 = scalar_lea.vmem %s1056, %s1072
                $region102: #{tpu_custom_call.1} parent=89 // loop_footer
                  %s1060 = sadd.s32 %s1058, 1
                $region103: #{tpu_custom_call.1} parent=89 // loop_footer_branch
                  %1057 = sbr.rel target = $region99
                $region104: #{tpu_custom_call.1} parent=89 // loop_exit
                  _
              $region90: #{tpu_custom_call.1} parent=67 // pred_fallthru
                _
              // Predicated region
              $region105: #{tpu_custom_call.1} parent=67 // pred_check
                _
              $region106: #{tpu_custom_call.1} parent=67 // pred_check_branch
                %1076 = sbr.rel target = $region108
              $region107: #{tpu_custom_call.1} parent=67 // pred_region
                _
              $region108: #{tpu_custom_call.1} parent=67 // pred_fallthru
                _
            $region68: #{tpu_custom_call.1} parent=63 // pred_fallthru
              _
            // Predicated region
            $region69: #{tpu_custom_call.1} parent=63 // pred_check
              _
            $region70: #{tpu_custom_call.1} parent=63 // pred_check_branch
              %932 = sbr.rel target = $region72
            $region71: #{tpu_custom_call.1} parent=63 // pred_region
              %s934 = ssub.s32 256, 1
              %s935 = sdiv.u32.pop %s921, 13
              %s936 = srem.u32.pop %s921, 13
              // While loop
              $region73: #{tpu_custom_call.1} parent=71 // loop_pre_header
                _
              $region74: #{tpu_custom_call.1} parent=71 // loop_header
                %s938 = sphi 0, %s940
                %p939 = scmp.ge.s32.totalorder %s938, %s935
                %s943 = sphi 0, %s974
                %s944 = sphi %s914, %s977
                %s945 = sphi %s925, %s978
              $region75: #{tpu_custom_call.1} parent=71 // loop_header_branch
                %942 = sbr.rel (%p939) target = $region79
              $region76: #{tpu_custom_call.1} parent=71 // loop_body
                %v946 = vld [vmem:[%s944] sm:%s934]
                %947 = vst [vmem:[%s945] sm:%s934] %v946
                %v948 = vld [vmem:[%s944 + $0x8] sm:%s934]
                %949 = vst [vmem:[%s945 + $0x8] sm:%s934] %v948
                %v950 = vld [vmem:[%s944 + $0x10] sm:%s934]
                %951 = vst [vmem:[%s945 + $0x10] sm:%s934] %v950
                %v952 = vld [vmem:[%s944 + $0x18] sm:%s934]
                %953 = vst [vmem:[%s945 + $0x18] sm:%s934] %v952
                %v954 = vld [vmem:[%s944 + $0x20] sm:%s934]
                %955 = vst [vmem:[%s945 + $0x20] sm:%s934] %v954
                %v956 = vld [vmem:[%s944 + $0x28] sm:%s934]
                %957 = vst [vmem:[%s945 + $0x28] sm:%s934] %v956
                %v958 = vld [vmem:[%s944 + $0x30] sm:%s934]
                %959 = vst [vmem:[%s945 + $0x30] sm:%s934] %v958
                %v960 = vld [vmem:[%s944 + $0x38] sm:%s934]
                %961 = vst [vmem:[%s945 + $0x38] sm:%s934] %v960
                %v962 = vld [vmem:[%s944 + $0x40] sm:%s934]
                %963 = vst [vmem:[%s945 + $0x40] sm:%s934] %v962
                %v964 = vld [vmem:[%s944 + $0x48] sm:%s934]
                %965 = vst [vmem:[%s945 + $0x48] sm:%s934] %v964
                %v966 = vld [vmem:[%s944 + $0x50] sm:%s934]
                %967 = vst [vmem:[%s945 + $0x50] sm:%s934] %v966
                %v968 = vld [vmem:[%s944 + $0x58] sm:%s934]
                %969 = vst [vmem:[%s945 + $0x58] sm:%s934] %v968
                %v970 = vld [vmem:[%s944 + $0x60] sm:%s934]
                %971 = vst [vmem:[%s945 + $0x60] sm:%s934] %v970
                %s972 = sadd.s32 1, %s943
                %p973 = scmp.ge.s32.totalorder %s972, %s935
                %s974 = scalar_select %p973, 0, %s972
                %s975 = smul.u32 %s974, 104
                %s976 = smul.u32 %s974, 104
                %s977 = scalar_lea.vmem %s914, %s975 [#allocation2]
                %s978 = scalar_lea.vmem %s925, %s976
              $region77: #{tpu_custom_call.1} parent=71 // loop_footer
                %s940 = sadd.s32 %s938, 1
              $region78: #{tpu_custom_call.1} parent=71 // loop_footer_branch
                %937 = sbr.rel target = $region74
              $region79: #{tpu_custom_call.1} parent=71 // loop_exit
                _
              %s979 = sdiv.u32.pop %s921, 13
              %s980 = srem.u32.pop %s921, 13
              %s981 = smul.u32 %s979, 13
              %s982 = smul.u32 8, %s981
              %s983 = scalar_lea.vmem %s914, %s982 [#allocation2]
              %s984 = smul.u32 8, %s981
              %s985 = scalar_lea.vmem %s925, %s984
              // While loop
              $region80: #{tpu_custom_call.1} parent=71 // loop_pre_header
                _
              $region81: #{tpu_custom_call.1} parent=71 // loop_header
                %s987 = sphi 0, %s989
                %p988 = scmp.ge.s32.totalorder %s987, %s980
                %s992 = sphi 0, %s999
                %s993 = sphi %s983, %s1002
                %s994 = sphi %s985, %s1003
              $region82: #{tpu_custom_call.1} parent=71 // loop_header_branch
                %991 = sbr.rel (%p988) target = $region86
              $region83: #{tpu_custom_call.1} parent=71 // loop_body
                %v995 = vld [vmem:[%s993] sm:%s934]
                %996 = vst [vmem:[%s994] sm:%s934] %v995
                %s997 = sadd.s32 1, %s992
                %p998 = scmp.ge.s32.totalorder %s997, %s980
                %s999 = scalar_select %p998, 0, %s997
                %s1000 = smul.u32 %s999, 8
                %s1001 = smul.u32 %s999, 8
                %s1002 = scalar_lea.vmem %s983, %s1000 [#allocation2]
                %s1003 = scalar_lea.vmem %s985, %s1001
              $region84: #{tpu_custom_call.1} parent=71 // loop_footer
                %s989 = sadd.s32 %s987, 1
              $region85: #{tpu_custom_call.1} parent=71 // loop_footer_branch
                %986 = sbr.rel target = $region81
              $region86: #{tpu_custom_call.1} parent=71 // loop_exit
                _
            $region72: #{tpu_custom_call.1} parent=63 // pred_fallthru
              _
          $region64: #{tpu_custom_call.1} parent=59 // pred_fallthru
            _
          %1077 = vnop
        $region60: #{tpu_custom_call.1} parent=55 // pred_fallthru
          _
      $region56: #{tpu_custom_call.1} parent=5 // pred_fallthru
        _
      %p1078 = scmp.le.s32.totalorder 2, %s15
      // Predicated region
      $region109: #{tpu_custom_call.1} parent=5 // pred_check
        %p1079 = pneg %p1078
      $region110: #{tpu_custom_call.1} parent=5 // pred_check_branch
        %1081 = sbr.rel (%p1079) target = $region112
      $region111: #{tpu_custom_call.1} parent=5 // pred_region
        %s1082 = ssub.s32 %s15, 2
        // Predicated region
        $region113: #{tpu_custom_call.1} parent=111 // pred_check
          %p1083 = pneg %p238
        $region114: #{tpu_custom_call.1} parent=111 // pred_check_branch
          %1085 = sbr.rel (%p1083) target = $region116
        $region115: #{tpu_custom_call.1} parent=111 // pred_region
          %s1086 = sand.u32 %s223, 1
          %s1087 = sand.u32 %s223, 1
          %s1088 = smul.addr %s1087, 104
          %s1089 = scalar_lea.vmem [#allocation2], %s1088
        $region116: #{tpu_custom_call.1} parent=111 // pred_fallthru
          _
      $region112: #{tpu_custom_call.1} parent=5 // pred_fallthru
        _
    $region6: #{tpu_custom_call.1} parent=1 // loop_footer
      %s19 = sadd.s32 1, %s15
    $region7: #{tpu_custom_call.1} parent=1 // loop_footer_branch
      %14 = sbr.rel target = $region3
    $region8: #{tpu_custom_call.1} parent=1 // loop_exit
      _

</llo_original>
